<compile_context>
chip_gen: v6e
topology: v6e:2x2x1
jax: 0.10.0
libtpu: 0.0.40
codegen_flags: <defaults>
</compile_context>

<pallas_src>
import jax
import jax.numpy as jnp
from jax.experimental import pallas as pl
from jax.experimental.pallas import tpu as pltpu


def linear_relu_kernel(x_ref, w_ref, b_ref, o_ref):
    # x_ref: (rows, 128) f32 in VMEM;  w_ref, b_ref: (1,) f32 in SMEM.
    w = w_ref[0]
    b = b_ref[0]
    o_ref[...] = jnp.maximum(x_ref[...] * w + b, 0.0)  # scalar*vec + scalar, ReLU


def neural_net_forward(x, weight, bias):
    """relu(x @ weight.T + bias) for x:(N,1), weight:(1,1), bias:(1,)."""
    n, f = x.shape
    assert f == 1 and weight.shape == (1, 1) and bias.shape == (1,)

    lanes = 128
    sublanes = 8
    chunk = lanes * sublanes  # pad so rows % 8 == 0 and cols == 128
    n_pad = pl.cdiv(n, chunk) * chunk
    rows = n_pad // lanes

    # Lane-dense slab: (N,1) -> flat -> pad -> (rows, 128)
    x_flat = x.reshape(-1)
    x_slab = jnp.pad(x_flat, (0, n_pad - n)).reshape(rows, lanes)

    out_slab = pl.pallas_call(
        linear_relu_kernel,
        out_shape=jax.ShapeDtypeStruct((rows, lanes), x.dtype),
        in_specs=[
            pl.BlockSpec(memory_space=pltpu.MemorySpace.VMEM),   # x slab (whole)
            pl.BlockSpec(memory_space=pltpu.MemorySpace.SMEM),   # weight scalar
            pl.BlockSpec(memory_space=pltpu.MemorySpace.SMEM),   # bias scalar
        ],
        out_specs=pl.BlockSpec(memory_space=pltpu.MemorySpace.VMEM),
    )(x_slab, weight.reshape(1), bias.reshape(1))

    # Slice padding off and restore (N, 1). ReLU of padded garbage is discarded here.
    return out_slab.reshape(-1)[:n].reshape(n, 1)


if __name__ == "__main__":
    # Input matching the module's usage: torch.linspace(-10, 10, 2000).view(-1, 1)
    x = jnp.linspace(-10.0, 10.0, 2000, dtype=jnp.float32).reshape(-1, 1)

    # Deterministic parameter init (nn.Linear default: U(-1/sqrt(in), 1/sqrt(in)), in=1)
    key = jax.random.PRNGKey(0)
    kw, kb = jax.random.split(key)
    weight = jax.random.uniform(kw, (1, 1), jnp.float32, minval=-1.0, maxval=1.0)
    bias = jax.random.uniform(kb, (1,), jnp.float32, minval=-1.0, maxval=1.0)

    out = neural_net_forward(x, weight, bias)
    out = jax.block_until_ready(out)

    # Reference check in plain JAX
    ref = jnp.maximum(x @ weight.T + bias, 0.0)
    assert out.shape == (2000, 1)
    assert jnp.allclose(out, ref, atol=1e-6), "mismatch vs reference"

    print("KERNEL_OK")
</pallas_src>

<mosaic_0001>
module attributes {stable_mosaic.version = 11 : i64} {
  func.func @linear_relu_kernel(%arg0: memref<16x128xf32, #tpu.memory_space<vmem>>, %arg1: memref<1xf32, #tpu.memory_space<smem>>, %arg2: memref<1xf32, #tpu.memory_space<smem>>, %arg3: memref<16x128xf32, #tpu.memory_space<vmem>>) attributes {dimension_semantics = [], scalar_prefetch = 0 : i64, scratch_operands = 0 : i64, tpu.core_type = #tpu.core_type<tc>} {
    %c0 = arith.constant 0 : index
    %0 = memref.load %arg1[%c0] : memref<1xf32, #tpu.memory_space<smem>>
    %c0_0 = arith.constant 0 : index
    %1 = memref.load %arg2[%c0_0] : memref<1xf32, #tpu.memory_space<smem>>
    %c0_1 = arith.constant 0 : index
    %c0_2 = arith.constant 0 : index
    %2 = vector.load %arg0[%c0_1, %c0_2] : memref<16x128xf32, #tpu.memory_space<vmem>>, vector<16x128xf32>
    %3 = vector.broadcast %0 : f32 to vector<16x128xf32>
    %4 = arith.mulf %2, %3 : vector<16x128xf32>
    %5 = vector.broadcast %1 : f32 to vector<16x128xf32>
    %6 = arith.addf %4, %5 : vector<16x128xf32>
    %cst = arith.constant 0.000000e+00 : f32
    %7 = vector.broadcast %cst : f32 to vector<16x128xf32>
    %8 = arith.maximumf %6, %7 : vector<16x128xf32>
    %c0_3 = arith.constant 0 : index
    %c0_4 = arith.constant 0 : index
    %9 = vector.load %arg3[%c0_3, %c0_4] : memref<16x128xf32, #tpu.memory_space<vmem>>, vector<16x128xf32>
    tpu.vector_store %arg3[%c0_3, %c0_4], %8 {strides = array<i32>} : memref<16x128xf32, #tpu.memory_space<vmem>>, vector<16x128xf32>,
    return
  }
}

</mosaic_0001>

<llo_original>
// kernel: tpu_custom_call.1
$region0: #{tpu_custom_call.1}
  #allocation0 [shape = 'u32[]', space=smem, size = 0x4, offset = 0x4, fixed_abs, tag = 'smem constant byte address 0x4 - core index']
  #allocation1 [shape = 'u32[144,128]{1,0:T(1,128)}', space=vmem, size = 0x12000, scoped, tag = 'internal scratch']
  #allocation2 [shape = 'f32[1]{0:T(128)S(6)}', space=smem, size = 0x200, scoped, tag = 'scoped memory for tpu_custom_call.1']
  #allocation3 [shape = 'f32[1]{0:T(128)S(6)}', space=smem, size = 0x200, scoped, tag = 'scoped memory for tpu_custom_call.1']
  %s0 = inlined_call_operand.hbm [shape: f32[16,128], index: 0, kind: input, shape index: {}]
  %s1 = inlined_call_operand.<no memory space> [shape: f32[1], index: 1, kind: input, shape index: {}]
  %s2 = inlined_call_operand.<no memory space> [shape: f32[1], index: 2, kind: input, shape index: {}]
  %s3 = inlined_call_operand.hbm [shape: f32[16,128], index: 3, kind: output, shape index: {}]
  %s4 = sld [smem:[#allocation0]]
  $region26: #{tpu_custom_call.1} parent=0
    _
  %s6 = ssub.s32 1, %s4
  %s7 = scalar_select 0, %s6, %s4
  %8 = sst [smem:[#allocation2]] %s1
  %9 = sst [smem:[#allocation3]] %s2
  $region1: #{tpu_custom_call.1} parent=0
    #allocation4 [shape = 'u8[8192]{0}', space=vmem, size = 0x2000, scoped, tag = 'input window, operand 0, single buffered']
    #allocation5 [shape = 's32[1]{0}', space=sflag, size = 0x4, scoped, tag = 'scoped memory for tpu_custom_call.1']
    #allocation6 [shape = 's32[1]{0}', space=sflag, size = 0x4, scoped, tag = 'scoped memory for tpu_custom_call.1']
    #allocation7 [shape = 'u8[8192]{0}', space=vmem, size = 0x2000, scoped, tag = 'output window, operand 0, single buffered']
    %10 = vsyncpa [#allocation5], 0
    %11 = vsyncpa [#allocation6], 0
    // Predicated region
    $region2: #{tpu_custom_call.1} parent=1 // pred_check
      _
    $region3: #{tpu_custom_call.1} parent=1 // pred_check_branch
      %13 = sbr.rel (0) target = $region5
    $region4: #{tpu_custom_call.1} parent=1 // pred_region
      %s15 = ssub.s32 256, 256
      %16 = vsyncadd [#allocation5], %s15
      %s17 = sshll.u32 [#allocation4], 4
      %s18 = int_to_ptr.vmem [resolvable:$true] %s17
      %23 = dma.hbm_to_vmem [thread:$0]  %s0, 256, %s18, [#allocation5], 128, 128, 8
    $region5: #{tpu_custom_call.1} parent=1 // pred_fallthru
      _
    // Predicated region
    $region6: #{tpu_custom_call.1} parent=1 // pred_check
      _
    $region7: #{tpu_custom_call.1} parent=1 // pred_check_branch
      %25 = sbr.rel (0) target = $region9
    $region8: #{tpu_custom_call.1} parent=1 // pred_region
      _
    $region9: #{tpu_custom_call.1} parent=1 // pred_fallthru
      _
    // Predicated region
    $region10: #{tpu_custom_call.1} parent=1 // pred_check
      _
    $region11: #{tpu_custom_call.1} parent=1 // pred_check_branch
      %27 = sbr.rel (0) target = $region13
    $region12: #{tpu_custom_call.1} parent=1 // pred_region
      _
    $region13: #{tpu_custom_call.1} parent=1 // pred_fallthru
      _
    // Predicated region
    $region14: #{tpu_custom_call.1} parent=1 // pred_check
      _
    $region15: #{tpu_custom_call.1} parent=1 // pred_check_branch
      %29 = sbr.rel (0) target = $region17
    $region16: #{tpu_custom_call.1} parent=1 // pred_region
      %30 = dma.done [#allocation5], 256
    $region17: #{tpu_custom_call.1} parent=1 // pred_fallthru
      _
    %s31 = sld [smem:[#allocation2]]
    %s32 = sld [smem:[#allocation3]]
    %v33 = vld [vmem:[#allocation4] sm:$0xff]
    %v34 = vld [vmem:[#allocation4 + $0x8] sm:$0xff]
    %v35 = vstv %s31
    %v36 = vmul.f32 %v33, %v35
    %v37 = vmul.f32 %v34, %v35
    %v38 = vstv %s32
    %v39 = vadd.f32 %v36, %v38
    %v40 = vadd.f32 %v37, %v38
    %v41 = vmax.f32 %v39, 0.0
    %v42 = vmax.f32 %v40, 0.0
    %43 = vst [vmem:[#allocation7] sm:$0xff] %v41
    %44 = vst [vmem:[#allocation7 + $0x8] sm:$0xff] %v42
    // Predicated region
    $region18: #{tpu_custom_call.1} parent=1 // pred_check
      _
    $region19: #{tpu_custom_call.1} parent=1 // pred_check_branch
      %46 = sbr.rel (0) target = $region21
    $region20: #{tpu_custom_call.1} parent=1 // pred_region
      %s48 = ssub.s32 256, 256
      %49 = vsyncadd [#allocation6], %s48
      %s50 = sshll.u32 [#allocation7], 4
      %s51 = int_to_ptr.vmem [resolvable:$true] %s50
      %56 = dma.vmem_to_hbm [thread:$0]  %s51, 256, %s3, [#allocation6], 128, 128, 8
    $region21: #{tpu_custom_call.1} parent=1 // pred_fallthru
      _
    // Predicated region
    $region22: #{tpu_custom_call.1} parent=1 // pred_check
      _
    $region23: #{tpu_custom_call.1} parent=1 // pred_check_branch
      %58 = sbr.rel (0) target = $region25
    $region24: #{tpu_custom_call.1} parent=1 // pred_region
      %59 = dma.done [#allocation6], 256
    $region25: #{tpu_custom_call.1} parent=1 // pred_fallthru
      _
    %60 = vsyncpa [#allocation5], 1
    %61 = vsyncpa [#allocation6], 1

</llo_original>
